<compile_context>
chip_gen: v5e
topology: v5e:2x2
jax: 0.10.0
libtpu: 0.0.40
codegen_flags: <defaults>
</compile_context>

<pallas_src>
import functools
import math

import jax
import jax.numpy as jnp
from jax.experimental import pallas as pl
from jax.experimental.pallas import tpu as pltpu


def _round_up(n, m):
    return ((n + m - 1) // m) * m


def _sine_pe_kernel(params_ref, o_ref, *, w_minus_1, tile_rows):
    """params_ref: (2, D_pad) [row 0 = inv_feature_dim (scales folded in),
                               row 1 = phase (0 / pi/2)]
       o_ref     : (rows, D_pad) output tile."""
    row = jax.lax.broadcasted_iota(jnp.int32, o_ref.shape, dimension=0)
    if tile_rows is not None:  # tiled (gridded) path: offset by the block row
        row = row + pl.program_id(0) * tile_rows
    x_embed = jnp.float32(w_minus_1) - row.astype(jnp.float32)   # (rows, D_pad)
    inv_fd = params_ref[0:1, :]                                  # (1, D_pad)
    phase = params_ref[1:2, :]                                   # (1, D_pad)
    # Single EUP sin per element; cos realized via the +pi/2 phase on odd cols.
    o_ref[...] = jnp.sin(x_embed * inv_fd + phase)


def sine_positional_encoding_1d(
    x,
    num_pos_feats=64,
    temperature=10000,
    normalize=False,
    scale=None,
    sampled_cols=None,
    sampled_rows=None,
):
    """JAX/Pallas port of SinePositionalEncoding1D.forward.

    x: [N, C, H, W] (only shapes are used, matching the reference).
    Returns: float32 array of shape [2*W - 1, num_pos_feats].
    """
    if scale is not None and not normalize:
        raise ValueError("normalize should be True if scale is passed")
    if scale is None:
        scale = 2 * math.pi

    _, _, _, w_full = x.shape
    w = w_full
    if sampled_cols is not None:
        w = sampled_cols.shape[-1]
    # sampled_rows only affects H, which the 1-D encoding never uses.

    L = 2 * w - 1
    D = num_pos_feats  # assumed even (matches the PyTorch stack/flatten)

    # ---- fold every per-position scalar into the per-feature reciprocal ----
    combined = 1.0
    if sampled_cols is not None:
        combined *= float(w_full) / float(w)
    if normalize:
        combined *= float(scale)

    i = jnp.arange(D, dtype=jnp.float32)
    fd = jnp.power(jnp.float32(temperature), 2.0 * jnp.floor(i / 2.0) / float(D))
    inv_fd = jnp.float32(combined) / fd                           # (D,)
    phase = jnp.where((jnp.arange(D) % 2) == 1,
                      jnp.float32(math.pi / 2.0), jnp.float32(0.0))

    # Lane-dense layout: features padded to a multiple of 128 lanes.
    D_pad = _round_up(D, 128)
    params = jnp.zeros((2, D_pad), dtype=jnp.float32)
    params = params.at[0, :D].set(inv_fd).at[1, :D].set(phase)

    SMALL_ROWS = 2048
    if L <= SMALL_ROWS:
        # Small-W path: single whole-array block, no grid / pipeline overhead.
        L_pad = _round_up(L, 8)
        kernel = functools.partial(_sine_pe_kernel, w_minus_1=w - 1,
                                   tile_rows=None)
        out = pl.pallas_call(
            kernel,
            out_shape=jax.ShapeDtypeStruct((L_pad, D_pad), jnp.float32),
            in_specs=[pl.BlockSpec(memory_space=pltpu.MemorySpace.VMEM)],
            out_specs=pl.BlockSpec(memory_space=pltpu.MemorySpace.VMEM),
        )(params)
    else:
        # Large-W path: tile the row axis, keep features whole and last.
        # 1024 x 128 x 4B = 512 KiB/tile -> comfortably under the scoped VMEM
        # limit even double-buffered on v7x's 64 MiB/TC.
        TR = 1024
        L_pad = _round_up(L, TR)
        kernel = functools.partial(_sine_pe_kernel, w_minus_1=w - 1,
                                   tile_rows=TR)
        out = pl.pallas_call(
            kernel,
            out_shape=jax.ShapeDtypeStruct((L_pad, D_pad), jnp.float32),
            grid=(L_pad // TR,),
            in_specs=[pl.BlockSpec((2, D_pad), lambda i: (0, 0))],
            out_specs=pl.BlockSpec((TR, D_pad), lambda i: (i, 0)),
            compiler_params=pltpu.CompilerParams(
                dimension_semantics=("parallel",)),
        )(params)

    return out[:L, :D]


def _reference(x, num_pos_feats=64, temperature=10000, normalize=False,
               scale=None, sampled_cols=None):
    """Pure-JAX reference mirroring the PyTorch code for verification."""
    if scale is None:
        scale = 2 * math.pi
    _, _, _, w_full = x.shape
    w = w_full
    if sampled_cols is not None:
        w = sampled_cols.shape[-1]
    L = 2 * w - 1
    x_embed = jnp.linspace(w - 1, -w + 1, L, dtype=jnp.float32)
    if sampled_cols is not None:
        x_embed = x_embed * (float(w_full) / float(w))
    if normalize:
        x_embed = x_embed * scale
    i = jnp.arange(num_pos_feats, dtype=jnp.float32)
    feature_dim = jnp.power(
        jnp.float32(temperature), 2.0 * jnp.floor(i / 2.0) / float(num_pos_feats)
    )
    pos_x = x_embed[:, None] / feature_dim[None, :]               # (L, D)
    pos = jnp.stack(
        (jnp.sin(pos_x[:, 0::2]), jnp.cos(pos_x[:, 1::2])), axis=2
    ).reshape(L, num_pos_feats)
    return pos


if __name__ == "__main__":
    key = jax.random.PRNGKey(0)
    # NCHW input; only its shape matters for this module.
    x = jax.random.normal(key, (2, 4, 16, 16), dtype=jnp.float32)

    # -- default path (small W, no grid) --
    out = sine_positional_encoding_1d(x, num_pos_feats=64, temperature=10000)
    out = jax.block_until_ready(out)
    ref = _reference(x, num_pos_feats=64, temperature=10000)
    assert out.shape == (2 * 16 - 1, 64), out.shape
    assert jnp.allclose(out, ref, atol=1e-5, rtol=1e-5), (
        float(jnp.max(jnp.abs(out - ref))))

    # -- normalize path (scale folded into inv_fd) --
    out_n = jax.block_until_ready(
        sine_positional_encoding_1d(x, num_pos_feats=64, normalize=True))
    ref_n = _reference(x, num_pos_feats=64, normalize=True)
    assert jnp.allclose(out_n, ref_n, atol=1e-4, rtol=1e-4), (
        float(jnp.max(jnp.abs(out_n - ref_n))))

    # -- sampled_cols path (only the shape of sampled_cols matters) --
    sampled_cols = jnp.zeros((2, 8), dtype=jnp.int32)
    out_s = jax.block_until_ready(
        sine_positional_encoding_1d(x, num_pos_feats=64,
                                    sampled_cols=sampled_cols))
    ref_s = _reference(x, num_pos_feats=64, sampled_cols=sampled_cols)
    assert out_s.shape == (2 * 8 - 1, 64), out_s.shape
    assert jnp.allclose(out_s, ref_s, atol=1e-4, rtol=1e-4), (
        float(jnp.max(jnp.abs(out_s - ref_s))))

    # -- large-W tiled/gridded path --
    x_big = jnp.zeros((1, 1, 1, 1200), dtype=jnp.float32)
    out_b = jax.block_until_ready(
        sine_positional_encoding_1d(x_big, num_pos_feats=64))
    ref_b = _reference(x_big, num_pos_feats=64)
    assert out_b.shape == (2 * 1200 - 1, 64), out_b.shape
    # multiply-by-reciprocal reorders f32 rounding for large arguments
    assert jnp.allclose(out_b, ref_b, atol=1e-3, rtol=1e-3), (
        float(jnp.max(jnp.abs(out_b - ref_b))))

    print("KERNEL_OK")
</pallas_src>

<mosaic_0001>
module attributes {stable_mosaic.version = 11 : i64} {
  func.func @_sine_pe_kernel(%arg0: memref<2x128xf32, #tpu.memory_space<vmem>>, %arg1: memref<32x128xf32, #tpu.memory_space<vmem>>) attributes {dimension_semantics = [], scalar_prefetch = 0 : i64, scratch_operands = 0 : i64, tpu.core_type = #tpu.core_type<tc>} {
    %0 = tpu.iota {dimensions = array<i32: 0>} : vector<32x128xi32>
    %1 = arith.sitofp %0 : vector<32x128xi32> to vector<32x128xf32>
    %cst = arith.constant 1.500000e+01 : f32
    %2 = vector.broadcast %cst : f32 to vector<32x128xf32>
    %3 = arith.subf %2, %1 : vector<32x128xf32>
    %c0 = arith.constant 0 : index
    %c0_0 = arith.constant 0 : index
    %4 = vector.load %arg0[%c0, %c0_0] : memref<2x128xf32, #tpu.memory_space<vmem>>, vector<1x128xf32>
    %c1 = arith.constant 1 : index
    %c0_1 = arith.constant 0 : index
    %5 = vector.load %arg0[%c1, %c0_1] : memref<2x128xf32, #tpu.memory_space<vmem>>, vector<1x128xf32>
    %6 = vector.broadcast %4 : vector<1x128xf32> to vector<32x128xf32>
    %7 = arith.mulf %3, %6 : vector<32x128xf32>
    %8 = vector.broadcast %5 : vector<1x128xf32> to vector<32x128xf32>
    %9 = arith.addf %7, %8 : vector<32x128xf32>
    %10 = math.sin %9 : vector<32x128xf32>
    %c0_2 = arith.constant 0 : index
    %c0_3 = arith.constant 0 : index
    %11 = vector.load %arg1[%c0_2, %c0_3] : memref<32x128xf32, #tpu.memory_space<vmem>>, vector<32x128xf32>
    tpu.vector_store %arg1[%c0_2, %c0_3], %10 {strides = array<i32>} : memref<32x128xf32, #tpu.memory_space<vmem>>, vector<32x128xf32>,
    return
  }
}

</mosaic_0001>

<llo_original>
// kernel: tpu_custom_call.1
$region0: #{tpu_custom_call.1}
  #allocation0 [shape = 'u32[]', space=smem, size = 0x4, offset = 0x4, fixed_abs, tag = 'smem constant byte address 0x4 - core index']
  #allocation1 [shape = 'u32[72,128]{1,0:T(1,128)}', space=vmem, size = 0x9000, scoped, tag = 'internal scratch']
  %s0 = inlined_call_operand.hbm [shape: f32[2,128], index: 0, kind: input, shape index: {}]
  %s1 = inlined_call_operand.hbm [shape: f32[32,128], index: 1, kind: output, shape index: {}]
  %s2 = sld [smem:[#allocation0]]
  $region18: #{tpu_custom_call.1} parent=0
    _
  %s4 = ssub.s32 1, %s2
  %s5 = scalar_select 0, %s4, %s2
  $region1: #{tpu_custom_call.1} parent=0
    #allocation2 [shape = 'u8[1024]{0}', space=vmem, size = 0x400, scoped, tag = 'input window, operand 0, single buffered']
    #allocation3 [shape = 's32[1]{0}', space=sflag, size = 0x4, scoped, tag = 'scoped memory for tpu_custom_call.1']
    #allocation4 [shape = 's32[1]{0}', space=sflag, size = 0x4, scoped, tag = 'scoped memory for tpu_custom_call.1']
    #allocation5 [shape = 'u8[16384]{0}', space=vmem, size = 0x4000, scoped, tag = 'output window, operand 0, single buffered']
    %6 = vsyncpa [#allocation3], 0
    %7 = vsyncpa [#allocation4], 0
    // Predicated region
    $region2: #{tpu_custom_call.1} parent=1 // pred_check
      _
    $region3: #{tpu_custom_call.1} parent=1 // pred_check_branch
      %9 = sbr.rel (0) target = $region5
    $region4: #{tpu_custom_call.1} parent=1 // pred_region
      %11 = vsyncadd [#allocation3], 0
      %s13 = sshll.u32 %s0, 4
      %s14 = int_to_ptr.hbm [resolvable:$true] %s13
      %s15 = sshll.u32 [#allocation2], 4
      %s16 = int_to_ptr.vmem [resolvable:$true] %s15
      %18 = dma.hbm_to_vmem [thread:$0]  %s14, 32, %s16, [#allocation3]
    $region5: #{tpu_custom_call.1} parent=1 // pred_fallthru
      _
    // Predicated region
    $region6: #{tpu_custom_call.1} parent=1 // pred_check
      _
    $region7: #{tpu_custom_call.1} parent=1 // pred_check_branch
      %20 = sbr.rel (0) target = $region9
    $region8: #{tpu_custom_call.1} parent=1 // pred_region
      %22 = dma.done [#allocation3], 32
    $region9: #{tpu_custom_call.1} parent=1 // pred_fallthru
      _
    %v23 = vlaneseq
    %v24 = vshrl.u32 %v23, 7
    %v25 = vadd.s32 %v24, 8
    %v26 = vadd.s32 %v24, 16
    %v27 = vadd.s32 %v24, 24
    %v28 = vcvt.s32.f32 %v24
    %v29 = vcvt.s32.f32 %v25
    %v30 = vcvt.s32.f32 %v26
    %v31 = vcvt.s32.f32 %v27
    %v32 = vsub.f32 15.0, %v28
    %v33 = vsub.f32 15.0, %v29
    %v34 = vsub.f32 15.0, %v30
    %v35 = vsub.f32 15.0, %v31
    %v36 = vld [vmem:[#allocation2] sm:$0x1]
    %v37 = vld [vmem:[#allocation2 + $0x1] sm:$0x1]
    %v38 = vperm.slane %v36, 0
    %v39 = vmul.f32 %v32, %v38
    %v40 = vmul.f32 %v33, %v38
    %v41 = vmul.f32 %v34, %v38
    %v42 = vmul.f32 %v35, %v38
    %v43 = vperm.slane %v37, 0
    %v44 = vadd.f32 %v39, %v43
    %v45 = vadd.f32 %v40, %v43
    %v46 = vadd.f32 %v41, %v43
    %v47 = vadd.f32 %v42, %v43
    %v48 = vand.u32 2147483647, %v44
    %vm49 = vcmp.le.f32.partialorder %v48, 0.7853982
    %vm50 = vcmp.lt.s32.totalorder %v44, 0
    %v51 = vand.u32 %v44, 2139095040
    %v52 = vshrl.u32 %v51, 23
    %v53 = vsub.s32 %v52, 127
    %v54 = vand.u32 2147483647, %v44
    %v55 = vand.u32 %v54, 8388607
    %v56 = vor.u32 %v55, 8388608
    %v57 = vsub.s32 0, %v56
    %v58 = vadd.s32 %v53, 1
    %vm59 = vcmp.gt.s32.totalorder %v58, 0
    %v60 = vsel %vm59, %v58, 0
    %v61 = vshrl.u32 %v60, 5
    %v62 = vand.u32 %v60, 31
    %v63 = vsub.s32 32, %v62
    %v64 = vshrl.u32 683565275, %v63
    %v65 = vshll.u32 683565275, %v62
    %v66 = vshrl.u32 2475754826, %v63
    %v67 = vor.u32 %v65, %v66
    %v68 = vshll.u32 2475754826, %v62
    %v69 = vshrl.u32 2131351028, %v63
    %v70 = vor.u32 %v68, %v69
    %v71 = vshll.u32 2131351028, %v62
    %v72 = vshrl.u32 2102212464, %v63
    %v73 = vor.u32 %v71, %v72
    %v74 = vshll.u32 2102212464, %v62
    %v75 = vshrl.u32 920167782, %v63
    %v76 = vor.u32 %v74, %v75
    %v77 = vshll.u32 920167782, %v62
    %v78 = vshrl.u32 1326507024, %v63
    %v79 = vor.u32 %v77, %v78
    %vm80 = vcmp.lt.s32.totalorder %v61, 1
    %vm81 = vcmp.lt.s32.totalorder %v61, 2
    %vm82 = vcmp.lt.s32.totalorder %v61, 3
    %vm83 = vcmp.lt.s32.totalorder %v61, 4
    %v84 = vsel %vm80, %v64, %v67
    %v85 = vsel %vm83, %v73, 2102212464
    %v86 = vsel %vm82, %v70, %v85
    %v87 = vsel %vm81, %v84, %v86
    %v88 = vsel %vm80, %v67, %v70
    %v89 = vsel %vm83, %v76, 920167782
    %v90 = vsel %vm82, %v73, %v89
    %v91 = vsel %vm81, %v88, %v90
    %v92 = vsel %vm80, %v70, %v73
    %v93 = vsel %vm83, %v79, 1326507024
    %v94 = vsel %vm82, %v76, %v93
    %v95 = vsel %vm81, %v92, %v94
    %v96 = vshll.u32 %v56, 8
    %v97 = vand.u32 %v96, 65535
    %v98 = vshrl.u32 %v96, 16
    %v99 = vand.u32 %v95, 65535
    %v100 = vshrl.u32 %v95, 16
    %v101 = vmul.u32 %v97, %v99
    %v102 = vmul.u32 %v97, %v100
    %v103 = vmul.u32 %v98, %v99
    %v104 = vmul.u32 %v98, %v100
    %v105 = vshll.u32 %v102, 16
    %v106 = vshrl.u32 %v102, 16
    %v107 = vshll.u32 %v103, 16
    %v108 = vshrl.u32 %v103, 16
    %vm109 = vc.u32 %v101, %v105
    %v110 = vsel %vm109, 1, 0
    %v111 = vadd.s32 %v101, %v105
    %v112 = vadd.s32 %v104, %v110
    %vm113 = vc.u32 %v111, %v107
    %v114 = vsel %vm113, 1, 0
    %v115 = vadd.s32 %v111, %v107
    %v116 = vadd.s32 %v112, %v114
    %v117 = vadd.s32 %v116, %v106
    %v118 = vadd.s32 %v117, %v108
    %v119 = vand.u32 %v96, 65535
    %v120 = vshrl.u32 %v96, 16
    %v121 = vand.u32 %v91, 65535
    %v122 = vshrl.u32 %v91, 16
    %v123 = vmul.u32 %v119, %v121
    %v124 = vmul.u32 %v119, %v122
    %v125 = vmul.u32 %v120, %v121
    %v126 = vmul.u32 %v120, %v122
    %v127 = vshll.u32 %v124, 16
    %v128 = vshrl.u32 %v124, 16
    %v129 = vshll.u32 %v125, 16
    %v130 = vshrl.u32 %v125, 16
    %vm131 = vc.u32 %v123, %v127
    %v132 = vsel %vm131, 1, 0
    %v133 = vadd.s32 %v123, %v127
    %v134 = vadd.s32 %v126, %v132
    %vm135 = vc.u32 %v133, %v129
    %v136 = vsel %vm135, 1, 0
    %v137 = vadd.s32 %v133, %v129
    %v138 = vadd.s32 %v134, %v136
    %v139 = vadd.s32 %v138, %v128
    %v140 = vadd.s32 %v139, %v130
    %v141 = vmul.u32 %v96, %v87
    %v142 = vadd.s32 %v118, %v137
    %vm143 = vc.u32 %v118, %v137
    %v144 = vadd.s32 %v140, 1
    %v145 = vsel %vm143, %v144, %v140
    %v146 = vadd.s32 %v141, %v145
    %v147 = vadd.s32 %v146, 536870912
    %v148 = vshrl.u32 %v147, 30
    %v149 = vshll.u32 %v148, 30
    %v150 = vsub.s32 %v146, %v149
    %vm151 = vcmp.lt.s32.totalorder %v150, 0
    %v152 = vsub.s32 0, %v150
    %v153 = vsel %vm151, %v152, %v150
    %v154 = vclz %v153
    %v155 = vsub.s32 %v154, 2
    %vm156 = vcmp.gt.s32.totalorder 0, %v155
    %v157 = vsel %vm156, 0, %v155
    %v158 = vsub.s32 32, %v157
    %v159 = vshll.u32 %v150, %v157
    %v160 = vshrl.u32 %v142, %v158
    %v161 = vor.u32 %v159, %v160
    %v162 = vsub.s32 4294967266, %v157
    %v163 = vadd.s32 %v162, 127
    %v164 = vshll.u32 %v163, 23
    %v165 = vor.u32 4788187, %v164
    %v166 = vand.u32 2147483647, %v165
    %v168 = vcvt.s32.f32 %v161
    %v169 = vmul.f32 %v168, %v166
    %v170 = vxor.u32 %v169, 2147483648
    %v171 = vsel %vm50, %v170, %v169
    %v172 = vsub.s32 4, %v148
    %v173 = vsel %vm50, %v172, %v148
    %v174 = vsel %vm49, %v44, %v171
    %v175 = vsel %vm49, 0, %v173
    %v176 = vmul.f32 %v174, %v174
    %v177 = vmul.f32 %v176, -0.001358992
    %v178 = vadd.f32 %v177, 0.041655596
    %v179 = vmul.f32 %v176, %v178
    %v180 = vadd.f32 %v179, -0.4999988
    %v181 = vmul.f32 %v176, %v180
    %v182 = vadd.f32 1.0, %v181
    %v183 = vmul.f32 %v174, %v174
    %v184 = vmul.f32 %v183, -0.00019511016
    %v185 = vadd.f32 %v184, 0.008332121
    %v186 = vmul.f32 %v183, %v185
    %v187 = vadd.f32 %v186, -0.16666654
    %v188 = vmul.f32 %v183, %v187
    %v189 = vadd.f32 %v188, 1.0
    %v190 = vmul.f32 %v189, %v174
    %vm191 = vweird.f32 %v44
    %v192 = vadd.s32 %v175, 3
    %v193 = vand.u32 %v192, 3
    %vm194 = vcmp.lt.s32.totalorder %v193, 2
    %vm195 = vcmp.eq.s32.totalorder %v193, 0
    %v196 = vxor.u32 %v190, 2147483648
    %v197 = vsel %vm195, %v182, %v196
    %vm198 = vcmp.eq.s32.totalorder %v193, 2
    %v199 = vxor.u32 %v182, 2147483648
    %v200 = vsel %vm198, %v199, %v190
    %v201 = vsel %vm194, %v197, %v200
    %v202 = vsel %vm191, nan, %v201
    %v203 = vand.u32 2147483647, %v45
    %vm204 = vcmp.le.f32.partialorder %v203, 0.7853982
    %vm205 = vcmp.lt.s32.totalorder %v45, 0
    %v206 = vand.u32 %v45, 2139095040
    %v207 = vshrl.u32 %v206, 23
    %v208 = vsub.s32 %v207, 127
    %v209 = vand.u32 2147483647, %v45
    %v210 = vand.u32 %v209, 8388607
    %v211 = vor.u32 %v210, 8388608
    %v212 = vsub.s32 0, %v211
    %v213 = vadd.s32 %v208, 1
    %vm214 = vcmp.gt.s32.totalorder %v213, 0
    %v215 = vsel %vm214, %v213, 0
    %v216 = vshrl.u32 %v215, 5
    %v217 = vand.u32 %v215, 31
    %v218 = vsub.s32 32, %v217
    %v219 = vshrl.u32 683565275, %v218
    %v220 = vshll.u32 683565275, %v217
    %v221 = vshrl.u32 2475754826, %v218
    %v222 = vor.u32 %v220, %v221
    %v223 = vshll.u32 2475754826, %v217
    %v224 = vshrl.u32 2131351028, %v218
    %v225 = vor.u32 %v223, %v224
    %v226 = vshll.u32 2131351028, %v217
    %v227 = vshrl.u32 2102212464, %v218
    %v228 = vor.u32 %v226, %v227
    %v229 = vshll.u32 2102212464, %v217
    %v230 = vshrl.u32 920167782, %v218
    %v231 = vor.u32 %v229, %v230
    %v232 = vshll.u32 920167782, %v217
    %v233 = vshrl.u32 1326507024, %v218
    %v234 = vor.u32 %v232, %v233
    %vm235 = vcmp.lt.s32.totalorder %v216, 1
    %vm236 = vcmp.lt.s32.totalorder %v216, 2
    %vm237 = vcmp.lt.s32.totalorder %v216, 3
    %vm238 = vcmp.lt.s32.totalorder %v216, 4
    %v239 = vsel %vm235, %v219, %v222
    %v240 = vsel %vm238, %v228, 2102212464
    %v241 = vsel %vm237, %v225, %v240
    %v242 = vsel %vm236, %v239, %v241
    %v243 = vsel %vm235, %v222, %v225
    %v244 = vsel %vm238, %v231, 920167782
    %v245 = vsel %vm237, %v228, %v244
    %v246 = vsel %vm236, %v243, %v245
    %v247 = vsel %vm235, %v225, %v228
    %v248 = vsel %vm238, %v234, 1326507024
    %v249 = vsel %vm237, %v231, %v248
    %v250 = vsel %vm236, %v247, %v249
    %v251 = vshll.u32 %v211, 8
    %v252 = vand.u32 %v251, 65535
    %v253 = vshrl.u32 %v251, 16
    %v254 = vand.u32 %v250, 65535
    %v255 = vshrl.u32 %v250, 16
    %v256 = vmul.u32 %v252, %v254
    %v257 = vmul.u32 %v252, %v255
    %v258 = vmul.u32 %v253, %v254
    %v259 = vmul.u32 %v253, %v255
    %v260 = vshll.u32 %v257, 16
    %v261 = vshrl.u32 %v257, 16
    %v262 = vshll.u32 %v258, 16
    %v263 = vshrl.u32 %v258, 16
    %vm264 = vc.u32 %v256, %v260
    %v265 = vsel %vm264, 1, 0
    %v266 = vadd.s32 %v256, %v260
    %v267 = vadd.s32 %v259, %v265
    %vm268 = vc.u32 %v266, %v262
    %v269 = vsel %vm268, 1, 0
    %v270 = vadd.s32 %v266, %v262
    %v271 = vadd.s32 %v267, %v269
    %v272 = vadd.s32 %v271, %v261
    %v273 = vadd.s32 %v272, %v263
    %v274 = vand.u32 %v251, 65535
    %v275 = vshrl.u32 %v251, 16
    %v276 = vand.u32 %v246, 65535
    %v277 = vshrl.u32 %v246, 16
    %v278 = vmul.u32 %v274, %v276
    %v279 = vmul.u32 %v274, %v277
    %v280 = vmul.u32 %v275, %v276
    %v281 = vmul.u32 %v275, %v277
    %v282 = vshll.u32 %v279, 16
    %v283 = vshrl.u32 %v279, 16
    %v284 = vshll.u32 %v280, 16
    %v285 = vshrl.u32 %v280, 16
    %vm286 = vc.u32 %v278, %v282
    %v287 = vsel %vm286, 1, 0
    %v288 = vadd.s32 %v278, %v282
    %v289 = vadd.s32 %v281, %v287
    %vm290 = vc.u32 %v288, %v284
    %v291 = vsel %vm290, 1, 0
    %v292 = vadd.s32 %v288, %v284
    %v293 = vadd.s32 %v289, %v291
    %v294 = vadd.s32 %v293, %v283
    %v295 = vadd.s32 %v294, %v285
    %v296 = vmul.u32 %v251, %v242
    %v297 = vadd.s32 %v273, %v292
    %vm298 = vc.u32 %v273, %v292
    %v299 = vadd.s32 %v295, 1
    %v300 = vsel %vm298, %v299, %v295
    %v301 = vadd.s32 %v296, %v300
    %v302 = vadd.s32 %v301, 536870912
    %v303 = vshrl.u32 %v302, 30
    %v304 = vshll.u32 %v303, 30
    %v305 = vsub.s32 %v301, %v304
    %vm306 = vcmp.lt.s32.totalorder %v305, 0
    %v307 = vsub.s32 0, %v305
    %v308 = vsel %vm306, %v307, %v305
    %v309 = vclz %v308
    %v310 = vsub.s32 %v309, 2
    %vm311 = vcmp.gt.s32.totalorder 0, %v310
    %v312 = vsel %vm311, 0, %v310
    %v313 = vsub.s32 32, %v312
    %v314 = vshll.u32 %v305, %v312
    %v315 = vshrl.u32 %v297, %v313
    %v316 = vor.u32 %v314, %v315
    %v317 = vsub.s32 4294967266, %v312
    %v318 = vadd.s32 %v317, 127
    %v319 = vshll.u32 %v318, 23
    %v320 = vor.u32 4788187, %v319
    %v321 = vand.u32 2147483647, %v320
    %v323 = vcvt.s32.f32 %v316
    %v324 = vmul.f32 %v323, %v321
    %v325 = vxor.u32 %v324, 2147483648
    %v326 = vsel %vm205, %v325, %v324
    %v327 = vsub.s32 4, %v303
    %v328 = vsel %vm205, %v327, %v303
    %v329 = vsel %vm204, %v45, %v326
    %v330 = vsel %vm204, 0, %v328
    %v331 = vmul.f32 %v329, %v329
    %v332 = vmul.f32 %v331, -0.001358992
    %v333 = vadd.f32 %v332, 0.041655596
    %v334 = vmul.f32 %v331, %v333
    %v335 = vadd.f32 %v334, -0.4999988
    %v336 = vmul.f32 %v331, %v335
    %v337 = vadd.f32 1.0, %v336
    %v338 = vmul.f32 %v329, %v329
    %v339 = vmul.f32 %v338, -0.00019511016
    %v340 = vadd.f32 %v339, 0.008332121
    %v341 = vmul.f32 %v338, %v340
    %v342 = vadd.f32 %v341, -0.16666654
    %v343 = vmul.f32 %v338, %v342
    %v344 = vadd.f32 %v343, 1.0
    %v345 = vmul.f32 %v344, %v329
    %vm346 = vweird.f32 %v45
    %v347 = vadd.s32 %v330, 3
    %v348 = vand.u32 %v347, 3
    %vm349 = vcmp.lt.s32.totalorder %v348, 2
    %vm350 = vcmp.eq.s32.totalorder %v348, 0
    %v351 = vxor.u32 %v345, 2147483648
    %v352 = vsel %vm350, %v337, %v351
    %vm353 = vcmp.eq.s32.totalorder %v348, 2
    %v354 = vxor.u32 %v337, 2147483648
    %v355 = vsel %vm353, %v354, %v345
    %v356 = vsel %vm349, %v352, %v355
    %v357 = vsel %vm346, nan, %v356
    %v358 = vand.u32 2147483647, %v46
    %vm359 = vcmp.le.f32.partialorder %v358, 0.7853982
    %vm360 = vcmp.lt.s32.totalorder %v46, 0
    %v361 = vand.u32 %v46, 2139095040
    %v362 = vshrl.u32 %v361, 23
    %v363 = vsub.s32 %v362, 127
    %v364 = vand.u32 2147483647, %v46
    %v365 = vand.u32 %v364, 8388607
    %v366 = vor.u32 %v365, 8388608
    %v367 = vsub.s32 0, %v366
    %v368 = vadd.s32 %v363, 1
    %vm369 = vcmp.gt.s32.totalorder %v368, 0
    %v370 = vsel %vm369, %v368, 0
    %v371 = vshrl.u32 %v370, 5
    %v372 = vand.u32 %v370, 31
    %v373 = vsub.s32 32, %v372
    %v374 = vshrl.u32 683565275, %v373
    %v375 = vshll.u32 683565275, %v372
    %v376 = vshrl.u32 2475754826, %v373
    %v377 = vor.u32 %v375, %v376
    %v378 = vshll.u32 2475754826, %v372
    %v379 = vshrl.u32 2131351028, %v373
    %v380 = vor.u32 %v378, %v379
    %v381 = vshll.u32 2131351028, %v372
    %v382 = vshrl.u32 2102212464, %v373
    %v383 = vor.u32 %v381, %v382
    %v384 = vshll.u32 2102212464, %v372
    %v385 = vshrl.u32 920167782, %v373
    %v386 = vor.u32 %v384, %v385
    %v387 = vshll.u32 920167782, %v372
    %v388 = vshrl.u32 1326507024, %v373
    %v389 = vor.u32 %v387, %v388
    %vm390 = vcmp.lt.s32.totalorder %v371, 1
    %vm391 = vcmp.lt.s32.totalorder %v371, 2
    %vm392 = vcmp.lt.s32.totalorder %v371, 3
    %vm393 = vcmp.lt.s32.totalorder %v371, 4
    %v394 = vsel %vm390, %v374, %v377
    %v395 = vsel %vm393, %v383, 2102212464
    %v396 = vsel %vm392, %v380, %v395
    %v397 = vsel %vm391, %v394, %v396
    %v398 = vsel %vm390, %v377, %v380
    %v399 = vsel %vm393, %v386, 920167782
    %v400 = vsel %vm392, %v383, %v399
    %v401 = vsel %vm391, %v398, %v400
    %v402 = vsel %vm390, %v380, %v383
    %v403 = vsel %vm393, %v389, 1326507024
    %v404 = vsel %vm392, %v386, %v403
    %v405 = vsel %vm391, %v402, %v404
    %v406 = vshll.u32 %v366, 8
    %v407 = vand.u32 %v406, 65535
    %v408 = vshrl.u32 %v406, 16
    %v409 = vand.u32 %v405, 65535
    %v410 = vshrl.u32 %v405, 16
    %v411 = vmul.u32 %v407, %v409
    %v412 = vmul.u32 %v407, %v410
    %v413 = vmul.u32 %v408, %v409
    %v414 = vmul.u32 %v408, %v410
    %v415 = vshll.u32 %v412, 16
    %v416 = vshrl.u32 %v412, 16
    %v417 = vshll.u32 %v413, 16
    %v418 = vshrl.u32 %v413, 16
    %vm419 = vc.u32 %v411, %v415
    %v420 = vsel %vm419, 1, 0
    %v421 = vadd.s32 %v411, %v415
    %v422 = vadd.s32 %v414, %v420
    %vm423 = vc.u32 %v421, %v417
    %v424 = vsel %vm423, 1, 0
    %v425 = vadd.s32 %v421, %v417
    %v426 = vadd.s32 %v422, %v424
    %v427 = vadd.s32 %v426, %v416
    %v428 = vadd.s32 %v427, %v418
    %v429 = vand.u32 %v406, 65535
    %v430 = vshrl.u32 %v406, 16
    %v431 = vand.u32 %v401, 65535
    %v432 = vshrl.u32 %v401, 16
    %v433 = vmul.u32 %v429, %v431
    %v434 = vmul.u32 %v429, %v432
    %v435 = vmul.u32 %v430, %v431
    %v436 = vmul.u32 %v430, %v432
    %v437 = vshll.u32 %v434, 16
    %v438 = vshrl.u32 %v434, 16
    %v439 = vshll.u32 %v435, 16
    %v440 = vshrl.u32 %v435, 16
    %vm441 = vc.u32 %v433, %v437
    %v442 = vsel %vm441, 1, 0
    %v443 = vadd.s32 %v433, %v437
    %v444 = vadd.s32 %v436, %v442
    %vm445 = vc.u32 %v443, %v439
    %v446 = vsel %vm445, 1, 0
    %v447 = vadd.s32 %v443, %v439
    %v448 = vadd.s32 %v444, %v446
    %v449 = vadd.s32 %v448, %v438
    %v450 = vadd.s32 %v449, %v440
    %v451 = vmul.u32 %v406, %v397
    %v452 = vadd.s32 %v428, %v447
    %vm453 = vc.u32 %v428, %v447
    %v454 = vadd.s32 %v450, 1
    %v455 = vsel %vm453, %v454, %v450
    %v456 = vadd.s32 %v451, %v455
    %v457 = vadd.s32 %v456, 536870912
    %v458 = vshrl.u32 %v457, 30
    %v459 = vshll.u32 %v458, 30
    %v460 = vsub.s32 %v456, %v459
    %vm461 = vcmp.lt.s32.totalorder %v460, 0
    %v462 = vsub.s32 0, %v460
    %v463 = vsel %vm461, %v462, %v460
    %v464 = vclz %v463
    %v465 = vsub.s32 %v464, 2
    %vm466 = vcmp.gt.s32.totalorder 0, %v465
    %v467 = vsel %vm466, 0, %v465
    %v468 = vsub.s32 32, %v467
    %v469 = vshll.u32 %v460, %v467
    %v470 = vshrl.u32 %v452, %v468
    %v471 = vor.u32 %v469, %v470
    %v472 = vsub.s32 4294967266, %v467
    %v473 = vadd.s32 %v472, 127
    %v474 = vshll.u32 %v473, 23
    %v475 = vor.u32 4788187, %v474
    %v476 = vand.u32 2147483647, %v475
    %v478 = vcvt.s32.f32 %v471
    %v479 = vmul.f32 %v478, %v476
    %v480 = vxor.u32 %v479, 2147483648
    %v481 = vsel %vm360, %v480, %v479
    %v482 = vsub.s32 4, %v458
    %v483 = vsel %vm360, %v482, %v458
    %v484 = vsel %vm359, %v46, %v481
    %v485 = vsel %vm359, 0, %v483
    %v486 = vmul.f32 %v484, %v484
    %v487 = vmul.f32 %v486, -0.001358992
    %v488 = vadd.f32 %v487, 0.041655596
    %v489 = vmul.f32 %v486, %v488
    %v490 = vadd.f32 %v489, -0.4999988
    %v491 = vmul.f32 %v486, %v490
    %v492 = vadd.f32 1.0, %v491
    %v493 = vmul.f32 %v484, %v484
    %v494 = vmul.f32 %v493, -0.00019511016
    %v495 = vadd.f32 %v494, 0.008332121
    %v496 = vmul.f32 %v493, %v495
    %v497 = vadd.f32 %v496, -0.16666654
    %v498 = vmul.f32 %v493, %v497
    %v499 = vadd.f32 %v498, 1.0
    %v500 = vmul.f32 %v499, %v484
    %vm501 = vweird.f32 %v46
    %v502 = vadd.s32 %v485, 3
    %v503 = vand.u32 %v502, 3
    %vm504 = vcmp.lt.s32.totalorder %v503, 2
    %vm505 = vcmp.eq.s32.totalorder %v503, 0
    %v506 = vxor.u32 %v500, 2147483648
    %v507 = vsel %vm505, %v492, %v506
    %vm508 = vcmp.eq.s32.totalorder %v503, 2
    %v509 = vxor.u32 %v492, 2147483648
    %v510 = vsel %vm508, %v509, %v500
    %v511 = vsel %vm504, %v507, %v510
    %v512 = vsel %vm501, nan, %v511
    %v513 = vand.u32 2147483647, %v47
    %vm514 = vcmp.le.f32.partialorder %v513, 0.7853982
    %vm515 = vcmp.lt.s32.totalorder %v47, 0
    %v516 = vand.u32 %v47, 2139095040
    %v517 = vshrl.u32 %v516, 23
    %v518 = vsub.s32 %v517, 127
    %v519 = vand.u32 2147483647, %v47
    %v520 = vand.u32 %v519, 8388607
    %v521 = vor.u32 %v520, 8388608
    %v522 = vsub.s32 0, %v521
    %v523 = vadd.s32 %v518, 1
    %vm524 = vcmp.gt.s32.totalorder %v523, 0
    %v525 = vsel %vm524, %v523, 0
    %v526 = vshrl.u32 %v525, 5
    %v527 = vand.u32 %v525, 31
    %v528 = vsub.s32 32, %v527
    %v529 = vshrl.u32 683565275, %v528
    %v530 = vshll.u32 683565275, %v527
    %v531 = vshrl.u32 2475754826, %v528
    %v532 = vor.u32 %v530, %v531
    %v533 = vshll.u32 2475754826, %v527
    %v534 = vshrl.u32 2131351028, %v528
    %v535 = vor.u32 %v533, %v534
    %v536 = vshll.u32 2131351028, %v527
    %v537 = vshrl.u32 2102212464, %v528
    %v538 = vor.u32 %v536, %v537
    %v539 = vshll.u32 2102212464, %v527
    %v540 = vshrl.u32 920167782, %v528
    %v541 = vor.u32 %v539, %v540
    %v542 = vshll.u32 920167782, %v527
    %v543 = vshrl.u32 1326507024, %v528
    %v544 = vor.u32 %v542, %v543
    %vm545 = vcmp.lt.s32.totalorder %v526, 1
    %vm546 = vcmp.lt.s32.totalorder %v526, 2
    %vm547 = vcmp.lt.s32.totalorder %v526, 3
    %vm548 = vcmp.lt.s32.totalorder %v526, 4
    %v549 = vsel %vm545, %v529, %v532
    %v550 = vsel %vm548, %v538, 2102212464
    %v551 = vsel %vm547, %v535, %v550
    %v552 = vsel %vm546, %v549, %v551
    %v553 = vsel %vm545, %v532, %v535
    %v554 = vsel %vm548, %v541, 920167782
    %v555 = vsel %vm547, %v538, %v554
    %v556 = vsel %vm546, %v553, %v555
    %v557 = vsel %vm545, %v535, %v538
    %v558 = vsel %vm548, %v544, 1326507024
    %v559 = vsel %vm547, %v541, %v558
    %v560 = vsel %vm546, %v557, %v559
    %v561 = vshll.u32 %v521, 8
    %v562 = vand.u32 %v561, 65535
    %v563 = vshrl.u32 %v561, 16
    %v564 = vand.u32 %v560, 65535
    %v565 = vshrl.u32 %v560, 16
    %v566 = vmul.u32 %v562, %v564
    %v567 = vmul.u32 %v562, %v565
    %v568 = vmul.u32 %v563, %v564
    %v569 = vmul.u32 %v563, %v565
    %v570 = vshll.u32 %v567, 16
    %v571 = vshrl.u32 %v567, 16
    %v572 = vshll.u32 %v568, 16
    %v573 = vshrl.u32 %v568, 16
    %vm574 = vc.u32 %v566, %v570
    %v575 = vsel %vm574, 1, 0
    %v576 = vadd.s32 %v566, %v570
    %v577 = vadd.s32 %v569, %v575
    %vm578 = vc.u32 %v576, %v572
    %v579 = vsel %vm578, 1, 0
    %v580 = vadd.s32 %v576, %v572
    %v581 = vadd.s32 %v577, %v579
    %v582 = vadd.s32 %v581, %v571
    %v583 = vadd.s32 %v582, %v573
    %v584 = vand.u32 %v561, 65535
    %v585 = vshrl.u32 %v561, 16
    %v586 = vand.u32 %v556, 65535
    %v587 = vshrl.u32 %v556, 16
    %v588 = vmul.u32 %v584, %v586
    %v589 = vmul.u32 %v584, %v587
    %v590 = vmul.u32 %v585, %v586
    %v591 = vmul.u32 %v585, %v587
    %v592 = vshll.u32 %v589, 16
    %v593 = vshrl.u32 %v589, 16
    %v594 = vshll.u32 %v590, 16
    %v595 = vshrl.u32 %v590, 16
    %vm596 = vc.u32 %v588, %v592
    %v597 = vsel %vm596, 1, 0
    %v598 = vadd.s32 %v588, %v592
    %v599 = vadd.s32 %v591, %v597
    %vm600 = vc.u32 %v598, %v594
    %v601 = vsel %vm600, 1, 0
    %v602 = vadd.s32 %v598, %v594
    %v603 = vadd.s32 %v599, %v601
    %v604 = vadd.s32 %v603, %v593
    %v605 = vadd.s32 %v604, %v595
    %v606 = vmul.u32 %v561, %v552
    %v607 = vadd.s32 %v583, %v602
    %vm608 = vc.u32 %v583, %v602
    %v609 = vadd.s32 %v605, 1
    %v610 = vsel %vm608, %v609, %v605
    %v611 = vadd.s32 %v606, %v610
    %v612 = vadd.s32 %v611, 536870912
    %v613 = vshrl.u32 %v612, 30
    %v614 = vshll.u32 %v613, 30
    %v615 = vsub.s32 %v611, %v614
    %vm616 = vcmp.lt.s32.totalorder %v615, 0
    %v617 = vsub.s32 0, %v615
    %v618 = vsel %vm616, %v617, %v615
    %v619 = vclz %v618
    %v620 = vsub.s32 %v619, 2
    %vm621 = vcmp.gt.s32.totalorder 0, %v620
    %v622 = vsel %vm621, 0, %v620
    %v623 = vsub.s32 32, %v622
    %v624 = vshll.u32 %v615, %v622
    %v625 = vshrl.u32 %v607, %v623
    %v626 = vor.u32 %v624, %v625
    %v627 = vsub.s32 4294967266, %v622
    %v628 = vadd.s32 %v627, 127
    %v629 = vshll.u32 %v628, 23
    %v630 = vor.u32 4788187, %v629
    %v631 = vand.u32 2147483647, %v630
    %v633 = vcvt.s32.f32 %v626
    %v634 = vmul.f32 %v633, %v631
    %v635 = vxor.u32 %v634, 2147483648
    %v636 = vsel %vm515, %v635, %v634
    %v637 = vsub.s32 4, %v613
    %v638 = vsel %vm515, %v637, %v613
    %v639 = vsel %vm514, %v47, %v636
    %v640 = vsel %vm514, 0, %v638
    %v641 = vmul.f32 %v639, %v639
    %v642 = vmul.f32 %v641, -0.001358992
    %v643 = vadd.f32 %v642, 0.041655596
    %v644 = vmul.f32 %v641, %v643
    %v645 = vadd.f32 %v644, -0.4999988
    %v646 = vmul.f32 %v641, %v645
    %v647 = vadd.f32 1.0, %v646
    %v648 = vmul.f32 %v639, %v639
    %v649 = vmul.f32 %v648, -0.00019511016
    %v650 = vadd.f32 %v649, 0.008332121
    %v651 = vmul.f32 %v648, %v650
    %v652 = vadd.f32 %v651, -0.16666654
    %v653 = vmul.f32 %v648, %v652
    %v654 = vadd.f32 %v653, 1.0
    %v655 = vmul.f32 %v654, %v639
    %vm656 = vweird.f32 %v47
    %v657 = vadd.s32 %v640, 3
    %v658 = vand.u32 %v657, 3
    %vm659 = vcmp.lt.s32.totalorder %v658, 2
    %vm660 = vcmp.eq.s32.totalorder %v658, 0
    %v661 = vxor.u32 %v655, 2147483648
    %v662 = vsel %vm660, %v647, %v661
    %vm663 = vcmp.eq.s32.totalorder %v658, 2
    %v664 = vxor.u32 %v647, 2147483648
    %v665 = vsel %vm663, %v664, %v655
    %v666 = vsel %vm659, %v662, %v665
    %v667 = vsel %vm656, nan, %v666
    %668 = vst [vmem:[#allocation5] sm:$0xff] %v202
    %669 = vst [vmem:[#allocation5 + $0x8] sm:$0xff] %v357
    %670 = vst [vmem:[#allocation5 + $0x10] sm:$0xff] %v512
    %671 = vst [vmem:[#allocation5 + $0x18] sm:$0xff] %v667
    // Predicated region
    $region10: #{tpu_custom_call.1} parent=1 // pred_check
      _
    $region11: #{tpu_custom_call.1} parent=1 // pred_check_branch
      %673 = sbr.rel (0) target = $region13
    $region12: #{tpu_custom_call.1} parent=1 // pred_region
      %675 = vsyncadd [#allocation4], 0
      %s676 = sshll.u32 [#allocation5], 4
      %s677 = int_to_ptr.vmem [resolvable:$true] %s676
      %s678 = sshll.u32 %s1, 4
      %s679 = int_to_ptr.hbm [resolvable:$true] %s678
      %684 = dma.vmem_to_hbm [thread:$0]  %s677, 512, %s679, [#allocation4], 128, 128, 8
    $region13: #{tpu_custom_call.1} parent=1 // pred_fallthru
      _
    // Predicated region
    $region14: #{tpu_custom_call.1} parent=1 // pred_check
      _
    $region15: #{tpu_custom_call.1} parent=1 // pred_check_branch
      %686 = sbr.rel (0) target = $region17
    $region16: #{tpu_custom_call.1} parent=1 // pred_region
      %688 = dma.done [#allocation4], 512
    $region17: #{tpu_custom_call.1} parent=1 // pred_fallthru
      _
    %689 = vsyncpa [#allocation3], 1
    %690 = vsyncpa [#allocation4], 1

</llo_original>
